<compile_context>
chip_gen: v6e
topology: v6e:2x2x1
jax: 0.10.0
libtpu: 0.0.40
codegen_flags: <defaults>
</compile_context>

<pallas_src>
import jax
import jax.numpy as jnp
from jax.experimental import pallas as pl
from jax.experimental.pallas import tpu as pltpu

_COMPUTE_DTYPE = jnp.bfloat16


# ----------------------------- weight-matrix glue -----------------------------

def _bilinear_matrix(out_size: int, in_size: int) -> jnp.ndarray:
    # TODO(synk): v2.Resize defaults to antialias=True (widened triangle filter
    # on downscale); plain half-pixel bilinear weights are used here.
    scale = in_size / out_size
    y = jnp.arange(out_size, dtype=jnp.float32)
    src = (y + 0.5) * scale - 0.5
    i0f = jnp.floor(src)
    w1 = src - i0f
    i0 = jnp.clip(i0f, 0, in_size - 1).astype(jnp.int32)
    i1 = jnp.clip(i0 + 1, 0, in_size - 1)
    oh0 = jax.nn.one_hot(i0, in_size, dtype=jnp.float32)
    oh1 = jax.nn.one_hot(i1, in_size, dtype=jnp.float32)
    return (1.0 - w1)[:, None] * oh0 + w1[:, None] * oh1


def _nearest_matrix(out_size: int, in_size: int) -> jnp.ndarray:
    # TODO(synk): matches legacy 'nearest' (floor); NEAREST_EXACT would differ.
    scale = in_size / out_size
    idx = jnp.clip(
        jnp.floor(jnp.arange(out_size, dtype=jnp.float32) * scale),
        0, in_size - 1).astype(jnp.int32)
    return jax.nn.one_hot(idx, in_size, dtype=jnp.float32)


def _reflect_crop_matrix(crop_size: int, in_size: int, offset: int, pad: int = 4) -> jnp.ndarray:
    # Selection matrix mapping (crop row in padded coords) -> (row of resized
    # image) using 'reflect' padding semantics (no edge repetition).
    p = jnp.arange(crop_size, dtype=jnp.int32) + offset - pad
    p = jnp.where(p < 0, -p, p)
    p = jnp.where(p >= in_size, 2 * (in_size - 1) - p, p)
    return jax.nn.one_hot(p, in_size, dtype=jnp.float32)


# --------------------------------- Pallas kernel -------------------------------

def _resize_crop_kernel(x_ref, r_ref, c_ref, o_ref, z_ref):
    # x_ref: (B*H, W) bf16   r_ref: (TH, H) bf16   c_ref: (W, TW) bf16
    # o_ref: (1, TH, B*TW)   z_ref: (H, B*TW) bf16 scratch
    _, h = r_ref.shape
    _, tw = c_ref.shape
    planes = x_ref.shape[0] // h

    # Batch of planes fused into the MXU M dimension: (B*H, W) @ (W, TW).
    y = jnp.dot(x_ref[...], c_ref[...], preferred_element_type=jnp.float32)
    y = y.astype(_COMPUTE_DTYPE)                       # (B*H, TW)

    # Re-stack planes along lanes so the second matmul and the output store
    # are lane-dense: z = (H, B*TW).  Static unroll over the plane batch.
    for b in range(planes):
        z_ref[:, b * tw:(b + 1) * tw] = y[b * h:(b + 1) * h, :]

    # (TH, H) @ (H, B*TW) -> (TH, B*TW): single wide matmul, lane-dense store.
    out = jnp.dot(r_ref[...], z_ref[...], preferred_element_type=jnp.float32)
    o_ref[0] = out.astype(o_ref.dtype)


def _choose_block_planes(p, h, w, tw, itemsize, vmem_budget_bytes=16 * 1024 * 1024):
    """Pick how many image planes to process per grid step.

    Constraints:
      * double-buffered input block (2 * B * H * W * itemsize) under a budget
        that is safe on v7x (64 MiB VMEM) as well as v5e/v6e (128 MiB);
      * keep >= 2 grid steps whenever possible (v7x has 2 TensorCores);
      * prefer lane-dense output blocks (B * TW >= 128) when reachable, then
        the largest feasible B (amortizes the ~0.35 us per-step overhead).
    """
    divisors = [d for d in range(1, p + 1) if p % d == 0]
    feasible = [d for d in divisors
                if 2 * d * h * w * itemsize <= vmem_budget_bytes
                and (p // d >= 2 or p == 1)]
    if not feasible:
        feasible = [1]
    lane_dense = [d for d in feasible if d * tw >= 128]
    return max(lane_dense) if lane_dense else max(feasible)


def random_crop_with_random_interp(x, r_mat, c_mat, crop_hw):
    """x: (N, C, H, W); r_mat: (TH, H); c_mat: (W, TW). Returns (N, C, TH, TW)."""
    n, ch, h, w = x.shape
    th, tw = crop_hw
    p = n * ch

    blk = _choose_block_planes(p, h, w, tw, jnp.dtype(_COMPUTE_DTYPE).itemsize)
    g = p // blk

    # Layout plumbing only (no transposes of the big input): planes stay
    # stacked along rows, so the kernel sees a ready-to-matmul (B*H, W) slab.
    x2 = x.reshape(p * h, w).astype(_COMPUTE_DTYPE)
    r = r_mat.astype(_COMPUTE_DTYPE)
    c = c_mat.astype(_COMPUTE_DTYPE)

    out = pl.pallas_call(
        _resize_crop_kernel,
        out_shape=jax.ShapeDtypeStruct((g, th, blk * tw), x.dtype),
        grid_spec=pltpu.PrefetchScalarGridSpec(
            num_scalar_prefetch=0,
            grid=(g,),
            in_specs=[
                pl.BlockSpec((blk * h, w), lambda i: (i, 0)),
                # Constant index_maps: the pipeline fetches these weights once.
                pl.BlockSpec((th, h), lambda i: (0, 0)),
                pl.BlockSpec((w, tw), lambda i: (0, 0)),
            ],
            out_specs=pl.BlockSpec((1, th, blk * tw), lambda i: (i, 0, 0)),
            scratch_shapes=[pltpu.VMEM((h, blk * tw), _COMPUTE_DTYPE)],
        ),
        compiler_params=pltpu.CompilerParams(
            dimension_semantics=("parallel",),
            vmem_limit_bytes=64 * 1024 * 1024,
        ),
    )(x2, r, c)

    # Un-stack planes from lanes: (G, TH, B*TW) -> (N, C, TH, TW).
    out = out.reshape(g, th, blk, tw)
    out = jnp.transpose(out, (0, 2, 1, 3))
    return out.reshape(n, ch, th, tw)


# ------------------------------------- main ------------------------------------

if __name__ == "__main__":
    key = jax.random.PRNGKey(0)
    k_x, k_interp, k_top, k_left = jax.random.split(key, 4)

    # Module config: size=(8, 8), interpolation=[BILINEAR, NEAREST]
    N, C, H, W = 2, 4, 16, 16
    size = (8, 8)
    pad = 4

    x = jax.random.normal(k_x, (N, C, H, W), dtype=jnp.float32)

    # Resize shorter side to min(size); long side uses int() truncation to
    # match torchvision.
    short = min(size)
    if H <= W:
        hr, wr = short, max(short, int(short * W / H))
    else:
        hr, wr = max(short, int(short * H / W)), short
    assert hr > pad and wr > pad, "reflect padding requires resized dims > pad"

    # random.choice(self.transform): pick interpolation (deterministic via PRNG)
    interp_idx = int(jax.random.randint(k_interp, (), 0, 2))  # 0=bilinear, 1=nearest
    if interp_idx == 0:
        a_h = _bilinear_matrix(hr, H)
        a_w = _bilinear_matrix(wr, W)
    else:
        a_h = _nearest_matrix(hr, H)
        a_w = _nearest_matrix(wr, W)

    # RandomCrop offsets over the reflect-padded (hr+8, wr+8) image
    top = int(jax.random.randint(k_top, (), 0, hr + 2 * pad - size[0] + 1))
    left = int(jax.random.randint(k_left, (), 0, wr + 2 * pad - size[1] + 1))

    s_h = _reflect_crop_matrix(size[0], hr, top, pad)      # (TH, Hr)
    s_w = _reflect_crop_matrix(size[1], wr, left, pad)     # (TW, Wr)

    r_mat = s_h @ a_h                  # (TH, H)
    c_mat = (s_w @ a_w).T              # (W, TW)

    out = random_crop_with_random_interp(x, r_mat, c_mat, size)
    out = jax.block_until_ready(out)
    assert out.shape == (N, C, size[0], size[1]), out.shape

    # Correctness vs a pure-JAX reference (bf16 kernel -> loose tolerance).
    ref = jnp.einsum('th,nchw,wv->nctv', r_mat, x, c_mat)
    max_err = float(jnp.max(jnp.abs(out - ref)))
    assert max_err < 0.1, f"mismatch vs reference: {max_err}"

    print("KERNEL_OK")
</pallas_src>

<mosaic_0001>
module attributes {stable_mosaic.version = 11 : i64} {
  func.func @_resize_crop_kernel(%arg0: i32, %arg1: memref<64x16xbf16, #tpu.memory_space<vmem>>, %arg2: memref<8x16xbf16, #tpu.memory_space<vmem>>, %arg3: memref<16x8xbf16, #tpu.memory_space<vmem>>, %arg4: memref<1x8x32xf32, #tpu.memory_space<vmem>>, %arg5: memref<16x32xbf16, #tpu.memory_space<vmem>>) attributes {dimension_semantics = [#tpu.dimension_semantics<parallel>], iteration_bounds = array<i64: 2>, scalar_prefetch = 0 : i64, scratch_operands = 1 : i64, tpu.core_type = #tpu.core_type<tc>, window_params = [{transform_indices = @transform_0, window_bounds = array<i64: 64, 16>}, {pipeline_mode = #tpu.pipeline_mode<synchronous>, transform_indices = @transform_1, window_bounds = array<i64: 8, 16>}, {pipeline_mode = #tpu.pipeline_mode<synchronous>, transform_indices = @transform_2, window_bounds = array<i64: 16, 8>}, {transform_indices = @transform_3, window_bounds = array<i64: 1, 8, 32>}]} {
    %c0 = arith.constant 0 : index
    %c0_0 = arith.constant 0 : index
    %0 = vector.load %arg1[%c0, %c0_0] : memref<64x16xbf16, #tpu.memory_space<vmem>>, vector<64x16xbf16>
    %c0_1 = arith.constant 0 : index
    %c0_2 = arith.constant 0 : index
    %1 = vector.load %arg3[%c0_1, %c0_2] : memref<16x8xbf16, #tpu.memory_space<vmem>>, vector<16x8xbf16>
    %cst = arith.constant dense<0.000000e+00> : vector<64x8xf32>
    %2 = tpu.matmul %0, %1, %cst {dimension_numbers = #tpu.dot_dimension_numbers<[1], [0], [0], [1], [0, 0, 1, 1], [], []>} : vector<64x16xbf16>, vector<16x8xbf16>, vector<64x8xf32> -> vector<64x8xf32>
    %3 = arith.truncf %2 : vector<64x8xf32> to vector<64x8xbf16>
    %4 = vector.extract_strided_slice %3 {offsets = [0, 0], sizes = [16, 8], strides = [1, 1]} : vector<64x8xbf16> to vector<16x8xbf16>
    %c0_3 = arith.constant 0 : index
    %c0_4 = arith.constant 0 : index
    %5 = vector.load %arg5[%c0_3, %c0_4] : memref<16x32xbf16, #tpu.memory_space<vmem>>, vector<16x8xbf16>
    tpu.vector_store %arg5[%c0_3, %c0_4], %4 {strides = array<i32>} : memref<16x32xbf16, #tpu.memory_space<vmem>>, vector<16x8xbf16>,
    %6 = vector.extract_strided_slice %3 {offsets = [16, 0], sizes = [16, 8], strides = [1, 1]} : vector<64x8xbf16> to vector<16x8xbf16>
    %c0_5 = arith.constant 0 : index
    %c8 = arith.constant 8 : index
    %7 = vector.load %arg5[%c0_5, %c8] : memref<16x32xbf16, #tpu.memory_space<vmem>>, vector<16x8xbf16>
    tpu.vector_store %arg5[%c0_5, %c8], %6 {strides = array<i32>} : memref<16x32xbf16, #tpu.memory_space<vmem>>, vector<16x8xbf16>,
    %8 = vector.extract_strided_slice %3 {offsets = [32, 0], sizes = [16, 8], strides = [1, 1]} : vector<64x8xbf16> to vector<16x8xbf16>
    %c0_6 = arith.constant 0 : index
    %c16 = arith.constant 16 : index
    %9 = vector.load %arg5[%c0_6, %c16] : memref<16x32xbf16, #tpu.memory_space<vmem>>, vector<16x8xbf16>
    tpu.vector_store %arg5[%c0_6, %c16], %8 {strides = array<i32>} : memref<16x32xbf16, #tpu.memory_space<vmem>>, vector<16x8xbf16>,
    %10 = vector.extract_strided_slice %3 {offsets = [48, 0], sizes = [16, 8], strides = [1, 1]} : vector<64x8xbf16> to vector<16x8xbf16>
    %c0_7 = arith.constant 0 : index
    %c24 = arith.constant 24 : index
    %11 = vector.load %arg5[%c0_7, %c24] : memref<16x32xbf16, #tpu.memory_space<vmem>>, vector<16x8xbf16>
    tpu.vector_store %arg5[%c0_7, %c24], %10 {strides = array<i32>} : memref<16x32xbf16, #tpu.memory_space<vmem>>, vector<16x8xbf16>,
    %c0_8 = arith.constant 0 : index
    %c0_9 = arith.constant 0 : index
    %12 = vector.load %arg2[%c0_8, %c0_9] : memref<8x16xbf16, #tpu.memory_space<vmem>>, vector<8x16xbf16>
    %c0_10 = arith.constant 0 : index
    %c0_11 = arith.constant 0 : index
    %13 = vector.load %arg5[%c0_10, %c0_11] : memref<16x32xbf16, #tpu.memory_space<vmem>>, vector<16x32xbf16>
    %cst_12 = arith.constant dense<0.000000e+00> : vector<8x32xf32>
    %14 = tpu.matmul %12, %13, %cst_12 {dimension_numbers = #tpu.dot_dimension_numbers<[1], [0], [0], [1], [0, 0, 1, 1], [], []>} : vector<8x16xbf16>, vector<16x32xbf16>, vector<8x32xf32> -> vector<8x32xf32>
    %c0_13 = arith.constant 0 : index
    %c0_14 = arith.constant 0 : index
    %c0_15 = arith.constant 0 : index
    %15 = vector.load %arg4[%c0_13, %c0_14, %c0_15] : memref<1x8x32xf32, #tpu.memory_space<vmem>>, vector<1x8x32xf32>
    %16 = vector.shape_cast %15 : vector<1x8x32xf32> to vector<8x32xf32>
    %17 = vector.shape_cast %14 : vector<8x32xf32> to vector<1x8x32xf32>
    tpu.vector_store %arg4[%c0_13, %c0_14, %c0_15], %17 {strides = array<i32>} : memref<1x8x32xf32, #tpu.memory_space<vmem>>, vector<1x8x32xf32>,
    return
  }
  func.func @transform_0(%arg0: i32) -> (i32, i32) {
    %c0_i32 = arith.constant 0 : i32
    %c0_i32_0 = arith.constant 0 : i32
    return %arg0, %c0_i32 : i32, i32
  }
  func.func @transform_1(%arg0: i32) -> (i32, i32) {
    %c0_i32 = arith.constant 0 : i32
    %c0_i32_0 = arith.constant 0 : i32
    %c0_i32_1 = arith.constant 0 : i32
    return %c0_i32, %c0_i32_0 : i32, i32
  }
  func.func @transform_2(%arg0: i32) -> (i32, i32) {
    %c0_i32 = arith.constant 0 : i32
    %c0_i32_0 = arith.constant 0 : i32
    %c0_i32_1 = arith.constant 0 : i32
    return %c0_i32, %c0_i32_0 : i32, i32
  }
  func.func @transform_3(%arg0: i32) -> (i32, i32, i32) {
    %c0_i32 = arith.constant 0 : i32
    %c0_i32_0 = arith.constant 0 : i32
    %c0_i32_1 = arith.constant 0 : i32
    return %arg0, %c0_i32, %c0_i32_0 : i32, i32, i32
  }
}

</mosaic_0001>

<llo_original>
// kernel: tpu_custom_call.1
$region0: #{tpu_custom_call.1}
  #allocation0 [shape = 'u32[]', space=smem, size = 0x4, offset = 0x4, fixed_abs, tag = 'smem constant byte address 0x4 - core index']
  #allocation1 [shape = 'u32[144,128]{1,0:T(1,128)}', space=vmem, size = 0x12000, scoped, tag = 'internal scratch']
  #allocation2 [shape = 'bf16[16,32]{1,0:T(8,128)(2,1)}', space=vmem, size = 0x1000, scoped, tag = 'scratch operand']
  %s0 = inlined_call_operand.vmem [shape: bf16[128,16], index: 0, kind: input, shape index: {}]
  %s1 = inlined_call_operand.vmem [shape: bf16[8,16], index: 1, kind: input, shape index: {}]
  %s2 = inlined_call_operand.vmem [shape: bf16[16,8], index: 2, kind: input, shape index: {}]
  %s3 = inlined_call_operand.hbm [shape: f32[2,8,32], index: 3, kind: output, shape index: {}]
  %s4 = sld [smem:[#allocation0]]
  $region45: #{tpu_custom_call.1} parent=0
    _
  %s6 = ssub.s32 1, %s4
  %s7 = scalar_select 0, %s6, %s4
  $region1: #{tpu_custom_call.1} parent=0
    #allocation3 [shape = 'u8[8192]{0}', space=vmem, size = 0x2000, scoped, tag = 'output window, operand 0']
    #allocation4 [shape = 's32[2]{0}', space=sflag, size = 0x8, scoped, tag = 'scoped memory for tpu_custom_call.1']
    %8 = vsyncpa [#allocation4], 0
    %s9 = scalar_lea.sflag [#allocation4], 1
    %10 = vsyncpa %s9, 0
    loop: start=0, step=1, limit=4
    $region2: #{tpu_custom_call.1} parent=1 // loop_pre_header
      _
    $region3: #{tpu_custom_call.1} parent=1 // loop_header
      %s12 = sphi 0, %s16
      %p13 = scmp.ge.s32.totalorder %s12, 4
      %s22 = sphi 0, %s24
      %s25 = sphi 0, %s22
      %s26 = sphi 0, %s25
      %s42 = sphi 0, %s26
      %s46 = sphi 0, %s46
      %s48 = sphi 0, %s46
      %s49 = sphi 0, %s48
      %s63 = sphi 0, %s49
      %s67 = sphi 0, %s67
      %s69 = sphi 0, %s67
      %s70 = sphi 0, %s69
      %s84 = sphi 0, %s70
      %s90 = sphi 0, %s92
      %s93 = sphi 0, %s90
      %s94 = sphi 0, %s93
      %s110 = sphi 0, %s94
    $region4: #{tpu_custom_call.1} parent=1 // loop_header_branch
      %15 = sbr.rel (%p13) target = $region8
    $region5: #{tpu_custom_call.1} parent=1 // loop_body
      %s17 = ssub.s32 %s12, 1
      %s18 = ssub.s32 %s12, 2
      %s19 = sadd.s32 %s12, 1
      %s20 = ssub.s32 %s12, %s19
      %p21 = scmp.eq.s32.totalorder %s20, 0
      %s23 = sadd.s32 %s22, 1
      %s24 = scalar_select %p21, %s22, %s23
      %p27 = pneg %p21
      %p28 = scmp.eq.s32.totalorder %s12, 1
      %p29 = por %p27, %p28
      %p30 = scmp.ne.s32.totalorder %s22, %s25
      %p31 = scmp.eq.s32.totalorder %s12, 0
      %p32 = por %p30, %p31
      %p33 = scmp.ne.s32.totalorder %s22, %s25
      %p34 = scmp.eq.s32.totalorder %s17, 1
      %p35 = por %p33, %p34
      %p36 = scmp.ne.s32.totalorder %s25, %s26
      %p37 = scmp.eq.s32.totalorder %s17, 0
      %p38 = por %p36, %p37
      %p39 = scmp.ne.s32.totalorder %s25, %s26
      %p40 = scmp.eq.s32.totalorder %s18, 1
      %p41 = por %p39, %p40
      %p43 = scmp.ne.s32.totalorder %s26, %s42
      %p44 = scmp.eq.s32.totalorder %s18, 0
      %p45 = por %p43, %p44
      %s47 = sadd.s32 %s46, 1
      %p50 = scmp.eq.s32.totalorder %s12, 1
      %p51 = scmp.ne.s32.totalorder %s46, %s48
      %p52 = scmp.eq.s32.totalorder %s12, 0
      %p53 = por %p51, %p52
      %p54 = scmp.ne.s32.totalorder %s46, %s48
      %p55 = scmp.eq.s32.totalorder %s17, 1
      %p56 = por %p54, %p55
      %p57 = scmp.ne.s32.totalorder %s48, %s49
      %p58 = scmp.eq.s32.totalorder %s17, 0
      %p59 = por %p57, %p58
      %p60 = scmp.ne.s32.totalorder %s48, %s49
      %p61 = scmp.eq.s32.totalorder %s18, 1
      %p62 = por %p60, %p61
      %p64 = scmp.ne.s32.totalorder %s49, %s63
      %p65 = scmp.eq.s32.totalorder %s18, 0
      %p66 = por %p64, %p65
      %s68 = sadd.s32 %s67, 1
      %p71 = scmp.eq.s32.totalorder %s12, 1
      %p72 = scmp.ne.s32.totalorder %s67, %s69
      %p73 = scmp.eq.s32.totalorder %s12, 0
      %p74 = por %p72, %p73
      %p75 = scmp.ne.s32.totalorder %s67, %s69
      %p76 = scmp.eq.s32.totalorder %s17, 1
      %p77 = por %p75, %p76
      %p78 = scmp.ne.s32.totalorder %s69, %s70
      %p79 = scmp.eq.s32.totalorder %s17, 0
      %p80 = por %p78, %p79
      %p81 = scmp.ne.s32.totalorder %s69, %s70
      %p82 = scmp.eq.s32.totalorder %s18, 1
      %p83 = por %p81, %p82
      %p85 = scmp.ne.s32.totalorder %s70, %s84
      %p86 = scmp.eq.s32.totalorder %s18, 0
      %p87 = por %p85, %p86
      %s88 = ssub.s32 %s12, %s19
      %p89 = scmp.eq.s32.totalorder %s88, 0
      %s91 = sadd.s32 %s90, 1
      %s92 = scalar_select %p89, %s90, %s91
      %p95 = pneg %p89
      %p96 = scmp.eq.s32.totalorder %s12, 1
      %p97 = por %p95, %p96
      %p98 = scmp.ne.s32.totalorder %s90, %s93
      %p99 = scmp.eq.s32.totalorder %s12, 0
      %p100 = por %p98, %p99
      %p101 = scmp.ne.s32.totalorder %s90, %s93
      %p102 = scmp.eq.s32.totalorder %s17, 1
      %p103 = por %p101, %p102
      %p104 = scmp.ne.s32.totalorder %s93, %s94
      %p105 = scmp.eq.s32.totalorder %s17, 0
      %p106 = por %p104, %p105
      %p107 = scmp.ne.s32.totalorder %s93, %s94
      %p108 = scmp.eq.s32.totalorder %s18, 1
      %p109 = por %p107, %p108
      %p111 = scmp.ne.s32.totalorder %s94, %s110
      %p112 = scmp.eq.s32.totalorder %s18, 0
      %p113 = por %p111, %p112
      %p114 = scmp.le.s32.totalorder 1, %s12
      %p115 = scmp.lt.s32.totalorder %s12, 3
      %p116 = pnand %p114, %p115
      %p117 = pneg %p116
      // Predicated region
      $region9: #{tpu_custom_call.1} parent=5 // pred_check
        _
      $region10: #{tpu_custom_call.1} parent=5 // pred_check_branch
        %119 = sbr.rel (%p116) target = $region12
      $region11: #{tpu_custom_call.1} parent=5 // pred_region
        %s120 = ssub.s32 %s12, 1
        // Predicated region
        $region13: #{tpu_custom_call.1} parent=11 // pred_check
          %p121 = pneg %p59
        $region14: #{tpu_custom_call.1} parent=11 // pred_check_branch
          %123 = sbr.rel (%p121) target = $region16
        $region15: #{tpu_custom_call.1} parent=11 // pred_region
          _
        $region16: #{tpu_custom_call.1} parent=11 // pred_fallthru
          _
        // Predicated region
        $region17: #{tpu_custom_call.1} parent=11 // pred_check
          %p124 = pneg %p80
        $region18: #{tpu_custom_call.1} parent=11 // pred_check_branch
          %126 = sbr.rel (%p124) target = $region20
        $region19: #{tpu_custom_call.1} parent=11 // pred_region
          _
        $region20: #{tpu_custom_call.1} parent=11 // pred_fallthru
          _
      $region12: #{tpu_custom_call.1} parent=5 // pred_fallthru
        _
      %p127 = scmp.lt.s32.totalorder %s12, 2
      // Predicated region
      $region21: #{tpu_custom_call.1} parent=5 // pred_check
        %p128 = pneg %p127
      $region22: #{tpu_custom_call.1} parent=5 // pred_check_branch
        %130 = sbr.rel (%p128) target = $region24
      $region23: #{tpu_custom_call.1} parent=5 // pred_region
        // Predicated region
        $region25: #{tpu_custom_call.1} parent=23 // pred_check
          %p131 = pneg %p32
        $region26: #{tpu_custom_call.1} parent=23 // pred_check_branch
          %133 = sbr.rel (%p131) target = $region28
        $region27: #{tpu_custom_call.1} parent=23 // pred_region
          %s134 = smul.u32 8, %s12
          %p135 = scmp.lt.s32.totalorder %s134, 15
          %s136 = scalar_select %p135, %s134, 15
          %s137 = smul.addr %s136, 4
          %s138 = scalar_lea.vmem %s0, %s137
          %s139 = smul.u32 8, %s12
        $region28: #{tpu_custom_call.1} parent=23 // pred_fallthru
          _
      $region24: #{tpu_custom_call.1} parent=5 // pred_fallthru
        _
      %p140 = scmp.le.s32.totalorder 1, %s12
      %p141 = scmp.lt.s32.totalorder %s12, 3
      %p142 = pnand %p140, %p141
      %p143 = pneg %p142
      // Predicated region
      $region29: #{tpu_custom_call.1} parent=5 // pred_check
        _
      $region30: #{tpu_custom_call.1} parent=5 // pred_check_branch
        %145 = sbr.rel (%p142) target = $region32
      $region31: #{tpu_custom_call.1} parent=5 // pred_region
        %s146 = ssub.s32 %s12, 1
        %s147 = smul.u32 8, %s17
        %p148 = scmp.lt.s32.totalorder %s147, 15
        %s149 = scalar_select %p148, %s147, 15
        %s150 = smul.addr %s149, 4
        %s151 = scalar_lea.vmem %s0, %s150
        %p152 = pneg %p38
        %p153 = pneg %p35
        %p154 = pneg %p59
        %p155 = pneg %p56
        %p156 = pneg %p80
        %p157 = pneg %p77
        %p158 = pneg %p106
        %p159 = pneg %p103
        %s160 = sand.u32 %s93, 1
        %s161 = scalar_lea.sflag [#allocation4], %s160
        %s162 = sand.u32 %s93, 1
        %s163 = smul.addr %s162, 8
        %s164 = scalar_lea.vmem [#allocation3], %s163
        %s165 = smul.u32 8, %s17
        %p166 = scmp.lt.s32.totalorder %s165, 15
        %s167 = scalar_select %p166, %s165, 15
        %s168 = smul.addr %s167, 4
        %s169 = scalar_lea.vmem %s0, %s168
        %s170 = smul.u32 8, %s17
        %v172 = vld [vmem:[%s169] sm:$0xf]
        %v173 = vld [vmem:[%s169 + $0x4] sm:$0xf]
        %v174 = vld [vmem:[%s169 + $0x8] sm:$0xf]
        %v175 = vld [vmem:[%s169 + $0xc] sm:$0xf]
        %v176 = vld [vmem:[%s169 + $0x10] sm:$0xf]
        %v177 = vld [vmem:[%s169 + $0x14] sm:$0xf]
        %v178 = vld [vmem:[%s169 + $0x18] sm:$0xf]
        %v179 = vld [vmem:[%s169 + $0x1c] sm:$0xf]
        %v180 = vld [vmem:[%s2] sm:$0xf]
        %v181 = vld [vmem:[%s2 + $0x4] sm:$0xf]
        %v190 = vunpack.c.l.b16 %v172
        %v191 = vunpack.c.l.b16 %v173
        %v192 = vunpack.c.l.b16 %v174
        %v193 = vunpack.c.l.b16 %v175
        %v194 = vunpack.c.l.b16 %v176
        %v195 = vunpack.c.l.b16 %v177
        %v196 = vunpack.c.l.b16 %v178
        %v197 = vunpack.c.l.b16 %v179
        %v198 = vpack.c.b16 %v191, %v190
        %v199 = vpack.c.b16 %v193, %v192
        %v200 = vpack.c.b16 %v195, %v194
        %v201 = vpack.c.b16 %v197, %v196
        %v204 = vunpack.c.l.b16 %v180
        %v205 = vunpack.c.l.b16 %v181
        %v206 = vpack.c.b16 %v205, %v204
        %vm208 = vcmask 130048
        %v210 = vsel %vm208, %v198, 0
        %v213 = vsel %vm208, %v199, 0
        %v216 = vsel %vm208, %v200, 0
        %v219 = vsel %vm208, %v201, 0
        %221 = vmatprep.subr.bf16.mxu0 0
        %222 = vmatpush1.bf16.msra.mxu0 0
        %223 = vmatprep.subr.bf16.mxu0 0
        %224 = vmatpush1.bf16.msra.mxu0 0
        %225 = vmatprep.subr.bf16.mxu0 0
        %226 = vmatpush1.bf16.msra.mxu0 0
        %227 = vmatprep.subr.bf16.mxu0 0
        %228 = vmatpush1.bf16.msra.mxu0 0
        %229 = vmatprep.subr.bf16.mxu0 0
        %230 = vmatpush1.bf16.msra.mxu0 0
        %231 = vmatprep.subr.bf16.mxu0 0
        %232 = vmatpush1.bf16.msra.mxu0 0
        %233 = vmatprep.subr.bf16.mxu0 0
        %234 = vmatpush1.bf16.msra.mxu0 0
        %235 = vmatprep.subr.bf16.mxu0 0
        %236 = vmatpush1.bf16.msra.mxu0 %v206
        %237 = vmatprep.subr.bf16.mxu0 0
        %238 = vmatpush2.bf16.msra.mxu0 0
        %239 = vmatprep.subr.bf16.mxu0 0
        %240 = vmatpush2.bf16.msra.mxu0 0
        %241 = vmatprep.subr.bf16.mxu0 0
        %242 = vmatpush2.bf16.msra.mxu0 0
        %243 = vmatprep.subr.bf16.mxu0 0
        %244 = vmatpush2.bf16.msra.mxu0 0
        %245 = vmatprep.subr.bf16.mxu0 0
        %246 = vmatpush2.bf16.msra.mxu0 0
        %247 = vmatprep.subr.bf16.mxu0 0
        %248 = vmatpush2.bf16.msra.mxu0 0
        %249 = vmatprep.subr.bf16.mxu0 0
        %250 = vmatpush2.bf16.msra.mxu0 0
        %251 = vmatprep.subr.bf16.mxu0 0
        %252 = vmatpush2.bf16.msra.mxu0 0
        %253 = vmatprep.mubr.bf16.mxu0 0
        %254 = vmatmul.mubr.bf16.gmra.mxu0 %v210
        %v255 = vpop.f32.mrf.mxu0
        %v256 = vadd.f32 0.0, %v255
        %v257 = vpop.f32.mrf.mxu0
        %v258 = vpop.f32.mrf.mxu0
        %v259 = vadd.f32 0.0, %v258
        %v260 = vpop.f32.mrf.mxu0
        %261 = vmatprep.mubr.bf16.mxu0 0
        %262 = vmatmul.mubr.bf16.gmra.mxu0 %v213
        %v263 = vpop.f32.mrf.mxu0
        %v264 = vadd.f32 0.0, %v263
        %v265 = vpop.f32.mrf.mxu0
        %v266 = vpop.f32.mrf.mxu0
        %v267 = vadd.f32 0.0, %v266
        %v268 = vpop.f32.mrf.mxu0
        %269 = vmatprep.mubr.bf16.mxu0 0
        %270 = vmatmul.mubr.bf16.gmra.mxu0 %v216
        %v271 = vpop.f32.mrf.mxu0
        %v272 = vadd.f32 0.0, %v271
        %v273 = vpop.f32.mrf.mxu0
        %v274 = vpop.f32.mrf.mxu0
        %v275 = vadd.f32 0.0, %v274
        %v276 = vpop.f32.mrf.mxu0
        %277 = vmatprep.mubr.bf16.mxu0 0
        %278 = vmatmul.mubr.bf16.gmra.mxu0 %v219
        %v279 = vpop.f32.mrf.mxu0
        %v280 = vadd.f32 0.0, %v279
        %v281 = vpop.f32.mrf.mxu0
        %v282 = vpop.f32.mrf.mxu0
        %v283 = vadd.f32 0.0, %v282
        %v284 = vpop.f32.mrf.mxu0
        %285 = vdwg.mxu0
        %v286 = vpack.c.bf16 %v259, %v256
        %v287 = vpack.c.bf16 %v267, %v264
        %v288 = vpack.c.bf16 %v275, %v272
        %v289 = vpack.c.bf16 %v283, %v280
        %v291 = vunpack.c.l.b16 %v286
        %v292 = vunpack.c.h.b16 %v286
        %v293 = vpack.c.b16 %v291, %v291
        %v294 = vpack.c.b16 %v292, %v292
        %vm297 = vcmask 60416
        %298 = vst.msk [vmem:[#allocation2] sm:$0xf] %vm297, %v293
        %299 = vst.msk [vmem:[#allocation2 + $0x4] sm:$0xf] %vm297, %v294
        %v301 = vunpack.c.l.b16 %v287
        %v302 = vunpack.c.h.b16 %v287
        %v303 = vpack.c.b16 %v301, %v301
        %v304 = vpack.c.b16 %v302, %v302
        %305 = vrot.lane.b32.xlu0 %v303, 8
        %v306 = vpop.permute.xlu0 %305
        %307 = vrot.lane.b32.xlu0 %v304, 8
        %v308 = vpop.permute.xlu0 %307
        %vm311 = vcmask 126016
        %312 = vst.msk [vmem:[#allocation2] sm:$0xf] %vm311, %v306
        %313 = vst.msk [vmem:[#allocation2 + $0x4] sm:$0xf] %vm311, %v308
        %v315 = vunpack.c.l.b16 %v288
        %v316 = vunpack.c.h.b16 %v288
        %v317 = vpack.c.b16 %v315, %v315
        %v318 = vpack.c.b16 %v316, %v316
        %319 = vrot.lane.b32.xlu0 %v317, 16
        %v320 = vpop.permute.xlu0 %319
        %321 = vrot.lane.b32.xlu0 %v318, 16
        %v322 = vpop.permute.xlu0 %321
        %vm325 = vcmask 191616
        %326 = vst.msk [vmem:[#allocation2] sm:$0xf] %vm325, %v320
        %327 = vst.msk [vmem:[#allocation2 + $0x4] sm:$0xf] %vm325, %v322
        %v329 = vunpack.c.l.b16 %v289
        %v330 = vunpack.c.h.b16 %v289
        %v331 = vpack.c.b16 %v329, %v329
        %v332 = vpack.c.b16 %v330, %v330
        %333 = vrot.lane.b32.xlu0 %v331, 24
        %v334 = vpop.permute.xlu0 %333
        %335 = vrot.lane.b32.xlu0 %v332, 24
        %v336 = vpop.permute.xlu0 %335
        %vm339 = vcmask 257216
        %340 = vst.msk [vmem:[#allocation2] sm:$0xf] %vm339, %v334
        %341 = vst.msk [vmem:[#allocation2 + $0x4] sm:$0xf] %vm339, %v336
        %v342 = vld [vmem:[%s1] sm:$0xf]
        %v343 = vld [vmem:[#allocation2] sm:$0xf]
        %v344 = vld [vmem:[#allocation2 + $0x4] sm:$0xf]
        %v347 = vunpack.c.l.b16 %v343
        %v348 = vunpack.c.l.b16 %v344
        %v349 = vpack.c.b16 %v348, %v347
        %v352 = vsel %vm208, %v342, 0
        %354 = vmatprep.subr.bf16.mxu0 0
        %355 = vmatpush1.bf16.msra.mxu0 0
        %356 = vmatprep.subr.bf16.mxu0 0
        %357 = vmatpush1.bf16.msra.mxu0 0
        %358 = vmatprep.subr.bf16.mxu0 0
        %359 = vmatpush1.bf16.msra.mxu0 0
        %360 = vmatprep.subr.bf16.mxu0 0
        %361 = vmatpush1.bf16.msra.mxu0 0
        %362 = vmatprep.subr.bf16.mxu0 0
        %363 = vmatpush1.bf16.msra.mxu0 0
        %364 = vmatprep.subr.bf16.mxu0 0
        %365 = vmatpush1.bf16.msra.mxu0 0
        %366 = vmatprep.subr.bf16.mxu0 0
        %367 = vmatpush1.bf16.msra.mxu0 0
        %368 = vmatprep.subr.bf16.mxu0 0
        %369 = vmatpush1.bf16.msra.mxu0 %v349
        %370 = vmatprep.subr.bf16.mxu0 0
        %371 = vmatpush2.bf16.msra.mxu0 0
        %372 = vmatprep.subr.bf16.mxu0 0
        %373 = vmatpush2.bf16.msra.mxu0 0
        %374 = vmatprep.subr.bf16.mxu0 0
        %375 = vmatpush2.bf16.msra.mxu0 0
        %376 = vmatprep.subr.bf16.mxu0 0
        %377 = vmatpush2.bf16.msra.mxu0 0
        %378 = vmatprep.subr.bf16.mxu0 0
        %379 = vmatpush2.bf16.msra.mxu0 0
        %380 = vmatprep.subr.bf16.mxu0 0
        %381 = vmatpush2.bf16.msra.mxu0 0
        %382 = vmatprep.subr.bf16.mxu0 0
        %383 = vmatpush2.bf16.msra.mxu0 0
        %384 = vmatprep.subr.bf16.mxu0 0
        %385 = vmatpush2.bf16.msra.mxu0 0
        %386 = vmatprep.mubr.bf16.mxu0 0
        %387 = vmatmul.mubr.bf16.gmra.mxu0 %v352
        %v388 = vpop.f32.mrf.mxu0
        %v389 = vadd.f32 0.0, %v388
        %v390 = vpop.f32.mrf.mxu0
        %v391 = vpop.f32.mrf.mxu0
        %v392 = vpop.f32.mrf.mxu0
        %393 = vdwg.mxu0
        %vm394 = vcmask 261120
        %395 = vst.msk [vmem:[%s164] sm:$0xff] %vm394, %v389
        %s396 = sand.u32 %s93, 1
        %s397 = scalar_lea.sflag [#allocation4], %s396
        %s398 = sand.u32 %s93, 1
        %s399 = smul.addr %s398, 8
        %s400 = scalar_lea.vmem [#allocation3], %s399
        // Predicated region
        $region33: #{tpu_custom_call.1} parent=31 // pred_check
          %p401 = pneg %p103
        $region34: #{tpu_custom_call.1} parent=31 // pred_check_branch
          %403 = sbr.rel (%p401) target = $region36
        $region35: #{tpu_custom_call.1} parent=31 // pred_region
          %s405 = ssub.s32 128, 128
          %406 = vsyncadd %s397, %s405
          %s407 = smul.addr %s17, 128
          %s408 = scalar_lea.hbm %s3, %s407
          %s410 = sshll.u32 %s400, 4
          %s411 = int_to_ptr.vmem [resolvable:$true] %s410
          %413 = dma.vmem_to_hbm [thread:$0]  %s411, 128, %s408, %s397
        $region36: #{tpu_custom_call.1} parent=31 // pred_fallthru
          _
      $region32: #{tpu_custom_call.1} parent=5 // pred_fallthru
        _
      %p414 = scmp.le.s32.totalorder 2, %s12
      // Predicated region
      $region37: #{tpu_custom_call.1} parent=5 // pred_check
        %p415 = pneg %p414
      $region38: #{tpu_custom_call.1} parent=5 // pred_check_branch
        %417 = sbr.rel (%p415) target = $region40
      $region39: #{tpu_custom_call.1} parent=5 // pred_region
        %s418 = ssub.s32 %s12, 2
        // Predicated region
        $region41: #{tpu_custom_call.1} parent=39 // pred_check
          %p419 = pneg %p109
        $region42: #{tpu_custom_call.1} parent=39 // pred_check_branch
          %421 = sbr.rel (%p419) target = $region44
        $region43: #{tpu_custom_call.1} parent=39 // pred_region
          %s422 = sand.u32 %s94, 1
          %s423 = scalar_lea.sflag [#allocation4], %s422
          %s424 = sand.u32 %s94, 1
          %s425 = smul.addr %s424, 8
          %s426 = scalar_lea.vmem [#allocation3], %s425
          %427 = dma.done %s423, 128
        $region44: #{tpu_custom_call.1} parent=39 // pred_fallthru
          _
      $region40: #{tpu_custom_call.1} parent=5 // pred_fallthru
        _
    $region6: #{tpu_custom_call.1} parent=1 // loop_footer
      %s16 = sadd.s32 1, %s12
    $region7: #{tpu_custom_call.1} parent=1 // loop_footer_branch
      %11 = sbr.rel target = $region3
    $region8: #{tpu_custom_call.1} parent=1 // loop_exit
      _
    %428 = vsyncpa [#allocation4], 1
    %s429 = scalar_lea.sflag [#allocation4], 1
    %430 = vsyncpa %s429, 1

</llo_original>
